<compile_context>
chip_gen: v7x
topology: tpu7x:2x2x1
jax: 0.10.0
libtpu: 0.0.40
codegen_flags: <defaults>
</compile_context>

<pallas_src>
import jax
import jax.numpy as jnp
from jax.experimental import pallas as pl
from jax.experimental.pallas import tpu as pltpu


def _se_kernel(x_ref, w1t_ref, w2t_ref, out_ref, y_ref):
    # x_ref:  (Bt, HW, C)   input dtype
    # w1t:    (C,  C//r)    excitation layer-1 weight, pre-transposed
    # w2t:    (C//r, C)     excitation layer-2 weight, pre-transposed
    # out:    (Bt, HW, C)
    # y:      (Bt, 1, C)
    x = x_ref[...]                                             # input dtype

    # squeeze: global average pool over the spatial (sublane) axis, f32 accum
    pooled = jnp.mean(x, axis=1, dtype=jnp.float32)            # (Bt, C)

    # excitation: Linear(C -> C/r, no bias) + ReLU
    h = jnp.dot(pooled, w1t_ref[...], preferred_element_type=jnp.float32)
    h = jnp.maximum(h, 0.0)                                    # (Bt, C//r)

    # Linear(C/r -> C, no bias) + Sigmoid
    s = jnp.dot(h, w2t_ref[...], preferred_element_type=jnp.float32)
    s = jax.nn.sigmoid(s)                                      # (Bt, C) f32

    # gate (lane-dense, C on lanes) and rescale in the *input* dtype
    g = s[:, None, :].astype(out_ref.dtype)                    # (Bt, 1, C)
    y_ref[...] = g.astype(y_ref.dtype)
    out_ref[...] = x * g                                       # (Bt, HW, C)


def _pick_block_batch(b, c, hw, itemsize, vmem_budget_bytes=8 << 20):
    """Largest Bt (dividing B) whose double-buffered in+out tiles fit a
    conservative VMEM budget (safe on v7x's 64 MiB), while keeping >= 2 grid
    steps when possible so both v7x TensorCores get work."""
    per_batch = 4 * hw * c * itemsize          # in + out, each double-buffered
    bt = max(1, min(b, vmem_budget_bytes // max(per_batch, 1)))
    if bt >= b and b > 1:
        bt = max(1, b // 2)                    # keep at least 2 grid steps
    while b % bt:
        bt -= 1
    return bt


def se_block_forward(x_nchw, w1, w2, *, block_batch=None):
    """x_nchw: (B, C, H, W); w1: (C//r, C); w2: (C, C//r).
    Returns (x * gate in NCHW, gate of shape (B, C, 1, 1))."""
    B, C, H, W = x_nchw.shape
    HW = H * W

    # layout plumbing: channels-last slab so C sits on the lane axis
    x = jnp.transpose(x_nchw.reshape(B, C, HW), (0, 2, 1))     # (B, HW, C)
    w1t = jnp.transpose(w1)                                    # (C, C//r)
    w2t = jnp.transpose(w2)                                    # (C//r, C)

    bt = block_batch or _pick_block_batch(B, C, HW, x.dtype.itemsize)
    if B % bt:
        raise ValueError(f"block_batch {bt} must divide batch {B}")
    grid = (B // bt,)

    out, gate = pl.pallas_call(
        _se_kernel,
        out_shape=(
            jax.ShapeDtypeStruct((B, HW, C), x.dtype),
            jax.ShapeDtypeStruct((B, 1, C), x.dtype),
        ),
        grid_spec=pltpu.PrefetchScalarGridSpec(
            num_scalar_prefetch=0,
            grid=grid,
            in_specs=[
                pl.BlockSpec((bt, HW, C), lambda b: (b, 0, 0)),
                pl.BlockSpec(w1t.shape, lambda b: (0, 0)),
                pl.BlockSpec(w2t.shape, lambda b: (0, 0)),
            ],
            out_specs=[
                pl.BlockSpec((bt, HW, C), lambda b: (b, 0, 0)),
                pl.BlockSpec((bt, 1, C), lambda b: (b, 0, 0)),
            ],
        ),
        compiler_params=pltpu.CompilerParams(
            dimension_semantics=("parallel",)),
    )(x, w1t, w2t)

    out_nchw = jnp.transpose(out, (0, 2, 1)).reshape(B, C, H, W)
    return out_nchw, gate.reshape(B, C, 1, 1)


def _reference(x, w1, w2):
    # pure-JAX reference matching the PyTorch forward
    y = jnp.mean(x, axis=(2, 3))                               # (B, C)
    h = jnp.maximum(y @ w1.T, 0.0)                             # (B, C//r)
    s = jax.nn.sigmoid(h @ w2.T)                               # (B, C)
    s4 = s[:, :, None, None]
    return x * s4, s4


if __name__ == "__main__":
    B, C, H, W = 4, 32, 8, 8
    r = 16
    hidden = C // r  # 2

    key = jax.random.PRNGKey(0)
    k_x, k_w1, k_w2 = jax.random.split(key, 3)
    x = jax.random.normal(k_x, (B, C, H, W), dtype=jnp.float32)
    # nn.Linear(c, c//r, bias=False).weight -> (c//r, c)
    w1 = jax.random.normal(k_w1, (hidden, C), dtype=jnp.float32) * 0.1
    # nn.Linear(c//r, c, bias=False).weight -> (c, c//r)
    w2 = jax.random.normal(k_w2, (C, hidden), dtype=jnp.float32) * 0.1

    out, y = se_block_forward(x, w1, w2)
    jax.block_until_ready((out, y))

    ref_out, ref_y = _reference(x, w1, w2)
    assert jnp.allclose(out, ref_out, atol=1e-5, rtol=1e-5)
    assert jnp.allclose(y, ref_y, atol=1e-5, rtol=1e-5)

    print("KERNEL_OK")
</pallas_src>

<mosaic_0001>
module attributes {stable_mosaic.version = 11 : i64} {
  func.func @_se_kernel(%arg0: i32, %arg1: memref<2x64x32xf32, #tpu.memory_space<vmem>>, %arg2: memref<32x2xf32, #tpu.memory_space<vmem>>, %arg3: memref<2x32xf32, #tpu.memory_space<vmem>>, %arg4: memref<2x64x32xf32, #tpu.memory_space<vmem>>, %arg5: memref<2x1x32xf32, #tpu.memory_space<vmem>>) attributes {dimension_semantics = [#tpu.dimension_semantics<parallel>], iteration_bounds = array<i64: 2>, scalar_prefetch = 0 : i64, scratch_operands = 0 : i64, tpu.core_type = #tpu.core_type<tc>, window_params = [{transform_indices = @transform_0, window_bounds = array<i64: 2, 64, 32>}, {pipeline_mode = #tpu.pipeline_mode<synchronous>, transform_indices = @transform_1, window_bounds = array<i64: 32, 2>}, {pipeline_mode = #tpu.pipeline_mode<synchronous>, transform_indices = @transform_2, window_bounds = array<i64: 2, 32>}, {transform_indices = @transform_3, window_bounds = array<i64: 2, 64, 32>}, {transform_indices = @transform_4, window_bounds = array<i64: 2, 1, 32>}]} {
    %c0 = arith.constant 0 : index
    %c0_0 = arith.constant 0 : index
    %c0_1 = arith.constant 0 : index
    %0 = vector.load %arg1[%c0, %c0_0, %c0_1] : memref<2x64x32xf32, #tpu.memory_space<vmem>>, vector<2x64x32xf32>
    %cst = arith.constant dense<0.000000e+00> : vector<2x32xf32>
    %1 = vector.multi_reduction <add>, %0, %cst [1] : vector<2x64x32xf32> to vector<2x32xf32>
    %cst_2 = arith.constant 6.400000e+01 : f32
    %2 = vector.broadcast %cst_2 : f32 to vector<2x32xf32>
    %3 = arith.divf %1, %2 : vector<2x32xf32>
    %c0_3 = arith.constant 0 : index
    %c0_4 = arith.constant 0 : index
    %4 = vector.load %arg2[%c0_3, %c0_4] : memref<32x2xf32, #tpu.memory_space<vmem>>, vector<32x2xf32>
    %cst_5 = arith.constant dense<0.000000e+00> : vector<2x2xf32>
    %5 = tpu.matmul %3, %4, %cst_5 {dimension_numbers = #tpu.dot_dimension_numbers<[1], [0], [0], [1], [0, 0, 1, 1], [], []>} : vector<2x32xf32>, vector<32x2xf32>, vector<2x2xf32> -> vector<2x2xf32>
    %cst_6 = arith.constant 0.000000e+00 : f32
    %6 = vector.broadcast %cst_6 : f32 to vector<2x2xf32>
    %7 = arith.maximumf %5, %6 : vector<2x2xf32>
    %c0_7 = arith.constant 0 : index
    %c0_8 = arith.constant 0 : index
    %8 = vector.load %arg3[%c0_7, %c0_8] : memref<2x32xf32, #tpu.memory_space<vmem>>, vector<2x32xf32>
    %cst_9 = arith.constant dense<0.000000e+00> : vector<2x32xf32>
    %9 = tpu.matmul %7, %8, %cst_9 {dimension_numbers = #tpu.dot_dimension_numbers<[1], [0], [0], [1], [0, 0, 1, 1], [], []>} : vector<2x2xf32>, vector<2x32xf32>, vector<2x32xf32> -> vector<2x32xf32>
    %10 = arith.negf %9 : vector<2x32xf32>
    %11 = math.exp %10 : vector<2x32xf32>
    %cst_10 = arith.constant 1.000000e+00 : f32
    %12 = vector.broadcast %cst_10 : f32 to vector<2x32xf32>
    %13 = arith.addf %12, %11 : vector<2x32xf32>
    %14 = arith.divf %12, %13 : vector<2x32xf32>
    %15 = vector.shape_cast %14 : vector<2x32xf32> to vector<2x1x32xf32>
    %c0_11 = arith.constant 0 : index
    %c0_12 = arith.constant 0 : index
    %c0_13 = arith.constant 0 : index
    %16 = vector.load %arg5[%c0_11, %c0_12, %c0_13] : memref<2x1x32xf32, #tpu.memory_space<vmem>>, vector<2x1x32xf32>
    tpu.vector_store %arg5[%c0_11, %c0_12, %c0_13], %15 {strides = array<i32>} : memref<2x1x32xf32, #tpu.memory_space<vmem>>, vector<2x1x32xf32>,
    %17 = vector.broadcast %15 : vector<2x1x32xf32> to vector<2x64x32xf32>
    %18 = arith.mulf %0, %17 : vector<2x64x32xf32>
    %c0_14 = arith.constant 0 : index
    %c0_15 = arith.constant 0 : index
    %c0_16 = arith.constant 0 : index
    %19 = vector.load %arg4[%c0_14, %c0_15, %c0_16] : memref<2x64x32xf32, #tpu.memory_space<vmem>>, vector<2x64x32xf32>
    tpu.vector_store %arg4[%c0_14, %c0_15, %c0_16], %18 {strides = array<i32>} : memref<2x64x32xf32, #tpu.memory_space<vmem>>, vector<2x64x32xf32>,
    return
  }
  func.func @transform_0(%arg0: i32) -> (i32, i32, i32) {
    %c0_i32 = arith.constant 0 : i32
    %c0_i32_0 = arith.constant 0 : i32
    %c0_i32_1 = arith.constant 0 : i32
    return %arg0, %c0_i32, %c0_i32_0 : i32, i32, i32
  }
  func.func @transform_1(%arg0: i32) -> (i32, i32) {
    %c0_i32 = arith.constant 0 : i32
    %c0_i32_0 = arith.constant 0 : i32
    %c0_i32_1 = arith.constant 0 : i32
    return %c0_i32, %c0_i32_0 : i32, i32
  }
  func.func @transform_2(%arg0: i32) -> (i32, i32) {
    %c0_i32 = arith.constant 0 : i32
    %c0_i32_0 = arith.constant 0 : i32
    %c0_i32_1 = arith.constant 0 : i32
    return %c0_i32, %c0_i32_0 : i32, i32
  }
  func.func @transform_3(%arg0: i32) -> (i32, i32, i32) {
    %c0_i32 = arith.constant 0 : i32
    %c0_i32_0 = arith.constant 0 : i32
    %c0_i32_1 = arith.constant 0 : i32
    return %arg0, %c0_i32, %c0_i32_0 : i32, i32, i32
  }
  func.func @transform_4(%arg0: i32) -> (i32, i32, i32) {
    %c0_i32 = arith.constant 0 : i32
    %c0_i32_0 = arith.constant 0 : i32
    %c0_i32_1 = arith.constant 0 : i32
    return %arg0, %c0_i32, %c0_i32_0 : i32, i32, i32
  }
}

</mosaic_0001>

<llo_original>
// kernel: tpu_custom_call.1
$region0: #{tpu_custom_call.1}
  #allocation0 [shape = 'u32[]', space=smem, size = 0x4, offset = 0x4, fixed_abs, tag = 'smem constant byte address 0x4 - core index']
  #allocation1 [shape = 'u32[144,128]{1,0:T(1,128)}', space=vmem, size = 0x12000, scoped, tag = 'internal scratch']
  %s0 = inlined_call_operand.vmem [shape: f32[4,64,32], index: 0, kind: input, shape index: {}]
  %s1 = inlined_call_operand.vmem [shape: f32[32,2], index: 1, kind: input, shape index: {}]
  %s2 = inlined_call_operand.vmem [shape: f32[2,32], index: 2, kind: input, shape index: {}]
  %s3 = inlined_call_operand.vmem [shape: f32[4,64,32], index: 3, kind: output, shape index: {0}]
  %s4 = inlined_call_operand.hbm [shape: f32[4,1,32], index: 4, kind: output, shape index: {1}]
  %5 = xla_tuple %s3, %s4
  %s6 = sld [smem:[#allocation0]]
  $region53: #{tpu_custom_call.1} parent=0
    _
  %s8 = ssub.s32 1, %s6
  %s9 = scalar_select 0, %s8, %s6
  $region1: #{tpu_custom_call.1} parent=0
    #allocation2 [shape = 'u8[2048]{0}', space=vmem, size = 0x800, scoped, tag = 'output window, operand 1']
    #allocation3 [shape = 's32[2]{0}', space=sflag, size = 0x8, scoped, tag = 'scoped memory for tpu_custom_call.1']
    %10 = vsyncpa [#allocation3], 0
    %s11 = scalar_lea.sflag [#allocation3], 1
    %12 = vsyncpa %s11, 0
    loop: start=0, step=1, limit=4
    $region2: #{tpu_custom_call.1} parent=1 // loop_pre_header
      _
    $region3: #{tpu_custom_call.1} parent=1 // loop_header
      %s14 = sphi 0, %s18
      %p15 = scmp.ge.s32.totalorder %s14, 4
      %s24 = sphi 0, %s26
      %s27 = sphi 0, %s24
      %s28 = sphi 0, %s27
      %s44 = sphi 0, %s28
      %s48 = sphi 0, %s48
      %s50 = sphi 0, %s48
      %s51 = sphi 0, %s50
      %s65 = sphi 0, %s51
      %s69 = sphi 0, %s69
      %s71 = sphi 0, %s69
      %s72 = sphi 0, %s71
      %s86 = sphi 0, %s72
      %s92 = sphi 0, %s94
      %s95 = sphi 0, %s92
      %s96 = sphi 0, %s95
      %s112 = sphi 0, %s96
      %s118 = sphi 0, %s120
      %s121 = sphi 0, %s118
      %s122 = sphi 0, %s121
      %s138 = sphi 0, %s122
    $region4: #{tpu_custom_call.1} parent=1 // loop_header_branch
      %17 = sbr.rel (%p15) target = $region8
    $region5: #{tpu_custom_call.1} parent=1 // loop_body
      %s19 = ssub.s32 %s14, 1
      %s20 = ssub.s32 %s14, 2
      %s21 = sadd.s32 %s14, 1
      %s22 = ssub.s32 %s14, %s21
      %p23 = scmp.eq.s32.totalorder %s22, 0
      %s25 = sadd.s32 %s24, 1
      %s26 = scalar_select %p23, %s24, %s25
      %p29 = pneg %p23
      %p30 = scmp.eq.s32.totalorder %s14, 1
      %p31 = por %p29, %p30
      %p32 = scmp.ne.s32.totalorder %s24, %s27
      %p33 = scmp.eq.s32.totalorder %s14, 0
      %p34 = por %p32, %p33
      %p35 = scmp.ne.s32.totalorder %s24, %s27
      %p36 = scmp.eq.s32.totalorder %s19, 1
      %p37 = por %p35, %p36
      %p38 = scmp.ne.s32.totalorder %s27, %s28
      %p39 = scmp.eq.s32.totalorder %s19, 0
      %p40 = por %p38, %p39
      %p41 = scmp.ne.s32.totalorder %s27, %s28
      %p42 = scmp.eq.s32.totalorder %s20, 1
      %p43 = por %p41, %p42
      %p45 = scmp.ne.s32.totalorder %s28, %s44
      %p46 = scmp.eq.s32.totalorder %s20, 0
      %p47 = por %p45, %p46
      %s49 = sadd.s32 %s48, 1
      %p52 = scmp.eq.s32.totalorder %s14, 1
      %p53 = scmp.ne.s32.totalorder %s48, %s50
      %p54 = scmp.eq.s32.totalorder %s14, 0
      %p55 = por %p53, %p54
      %p56 = scmp.ne.s32.totalorder %s48, %s50
      %p57 = scmp.eq.s32.totalorder %s19, 1
      %p58 = por %p56, %p57
      %p59 = scmp.ne.s32.totalorder %s50, %s51
      %p60 = scmp.eq.s32.totalorder %s19, 0
      %p61 = por %p59, %p60
      %p62 = scmp.ne.s32.totalorder %s50, %s51
      %p63 = scmp.eq.s32.totalorder %s20, 1
      %p64 = por %p62, %p63
      %p66 = scmp.ne.s32.totalorder %s51, %s65
      %p67 = scmp.eq.s32.totalorder %s20, 0
      %p68 = por %p66, %p67
      %s70 = sadd.s32 %s69, 1
      %p73 = scmp.eq.s32.totalorder %s14, 1
      %p74 = scmp.ne.s32.totalorder %s69, %s71
      %p75 = scmp.eq.s32.totalorder %s14, 0
      %p76 = por %p74, %p75
      %p77 = scmp.ne.s32.totalorder %s69, %s71
      %p78 = scmp.eq.s32.totalorder %s19, 1
      %p79 = por %p77, %p78
      %p80 = scmp.ne.s32.totalorder %s71, %s72
      %p81 = scmp.eq.s32.totalorder %s19, 0
      %p82 = por %p80, %p81
      %p83 = scmp.ne.s32.totalorder %s71, %s72
      %p84 = scmp.eq.s32.totalorder %s20, 1
      %p85 = por %p83, %p84
      %p87 = scmp.ne.s32.totalorder %s72, %s86
      %p88 = scmp.eq.s32.totalorder %s20, 0
      %p89 = por %p87, %p88
      %s90 = ssub.s32 %s14, %s21
      %p91 = scmp.eq.s32.totalorder %s90, 0
      %s93 = sadd.s32 %s92, 1
      %s94 = scalar_select %p91, %s92, %s93
      %p97 = pneg %p91
      %p98 = scmp.eq.s32.totalorder %s14, 1
      %p99 = por %p97, %p98
      %p100 = scmp.ne.s32.totalorder %s92, %s95
      %p101 = scmp.eq.s32.totalorder %s14, 0
      %p102 = por %p100, %p101
      %p103 = scmp.ne.s32.totalorder %s92, %s95
      %p104 = scmp.eq.s32.totalorder %s19, 1
      %p105 = por %p103, %p104
      %p106 = scmp.ne.s32.totalorder %s95, %s96
      %p107 = scmp.eq.s32.totalorder %s19, 0
      %p108 = por %p106, %p107
      %p109 = scmp.ne.s32.totalorder %s95, %s96
      %p110 = scmp.eq.s32.totalorder %s20, 1
      %p111 = por %p109, %p110
      %p113 = scmp.ne.s32.totalorder %s96, %s112
      %p114 = scmp.eq.s32.totalorder %s20, 0
      %p115 = por %p113, %p114
      %s116 = ssub.s32 %s14, %s21
      %p117 = scmp.eq.s32.totalorder %s116, 0
      %s119 = sadd.s32 %s118, 1
      %s120 = scalar_select %p117, %s118, %s119
      %p123 = pneg %p117
      %p124 = scmp.eq.s32.totalorder %s14, 1
      %p125 = por %p123, %p124
      %p126 = scmp.ne.s32.totalorder %s118, %s121
      %p127 = scmp.eq.s32.totalorder %s14, 0
      %p128 = por %p126, %p127
      %p129 = scmp.ne.s32.totalorder %s118, %s121
      %p130 = scmp.eq.s32.totalorder %s19, 1
      %p131 = por %p129, %p130
      %p132 = scmp.ne.s32.totalorder %s121, %s122
      %p133 = scmp.eq.s32.totalorder %s19, 0
      %p134 = por %p132, %p133
      %p135 = scmp.ne.s32.totalorder %s121, %s122
      %p136 = scmp.eq.s32.totalorder %s20, 1
      %p137 = por %p135, %p136
      %p139 = scmp.ne.s32.totalorder %s122, %s138
      %p140 = scmp.eq.s32.totalorder %s20, 0
      %p141 = por %p139, %p140
      %p142 = scmp.le.s32.totalorder 1, %s14
      %p143 = scmp.lt.s32.totalorder %s14, 3
      %p144 = pnand %p142, %p143
      %p145 = pneg %p144
      // Predicated region
      $region9: #{tpu_custom_call.1} parent=5 // pred_check
        _
      $region10: #{tpu_custom_call.1} parent=5 // pred_check_branch
        %147 = sbr.rel (%p144) target = $region12
      $region11: #{tpu_custom_call.1} parent=5 // pred_region
        %s148 = ssub.s32 %s14, 1
        // Predicated region
        $region13: #{tpu_custom_call.1} parent=11 // pred_check
          %p149 = pneg %p61
        $region14: #{tpu_custom_call.1} parent=11 // pred_check_branch
          %151 = sbr.rel (%p149) target = $region16
        $region15: #{tpu_custom_call.1} parent=11 // pred_region
          _
        $region16: #{tpu_custom_call.1} parent=11 // pred_fallthru
          _
        // Predicated region
        $region17: #{tpu_custom_call.1} parent=11 // pred_check
          %p152 = pneg %p82
        $region18: #{tpu_custom_call.1} parent=11 // pred_check_branch
          %154 = sbr.rel (%p152) target = $region20
        $region19: #{tpu_custom_call.1} parent=11 // pred_region
          _
        $region20: #{tpu_custom_call.1} parent=11 // pred_fallthru
          _
      $region12: #{tpu_custom_call.1} parent=5 // pred_fallthru
        _
      %p155 = scmp.lt.s32.totalorder %s14, 2
      // Predicated region
      $region21: #{tpu_custom_call.1} parent=5 // pred_check
        %p156 = pneg %p155
      $region22: #{tpu_custom_call.1} parent=5 // pred_check_branch
        %158 = sbr.rel (%p156) target = $region24
      $region23: #{tpu_custom_call.1} parent=5 // pred_region
        // Predicated region
        $region25: #{tpu_custom_call.1} parent=23 // pred_check
          %p159 = pneg %p34
        $region26: #{tpu_custom_call.1} parent=23 // pred_check_branch
          %161 = sbr.rel (%p159) target = $region28
        $region27: #{tpu_custom_call.1} parent=23 // pred_region
          %s162 = smul.u32 2, %s14
          %p163 = scmp.lt.s32.totalorder %s162, 3
          %s164 = scalar_select %p163, %s162, 3
          %s165 = smul.addr %s164, 8
          %s166 = smul.addr %s165, 8
          %s167 = scalar_lea.vmem %s0, %s166
          %s168 = smul.u32 2, %s14
        $region28: #{tpu_custom_call.1} parent=23 // pred_fallthru
          _
      $region24: #{tpu_custom_call.1} parent=5 // pred_fallthru
        _
      %p169 = scmp.le.s32.totalorder 1, %s14
      %p170 = scmp.lt.s32.totalorder %s14, 3
      %p171 = pnand %p169, %p170
      %p172 = pneg %p171
      // Predicated region
      $region29: #{tpu_custom_call.1} parent=5 // pred_check
        _
      $region30: #{tpu_custom_call.1} parent=5 // pred_check_branch
        %174 = sbr.rel (%p171) target = $region32
      $region31: #{tpu_custom_call.1} parent=5 // pred_region
        %s175 = ssub.s32 %s14, 1
        %s176 = smul.u32 2, %s19
        %p177 = scmp.lt.s32.totalorder %s176, 3
        %s178 = scalar_select %p177, %s176, 3
        %s179 = smul.addr %s178, 8
        %s180 = smul.addr %s179, 8
        %s181 = scalar_lea.vmem %s0, %s180
        %p182 = pneg %p40
        %p183 = pneg %p37
        %p184 = pneg %p61
        %p185 = pneg %p58
        %p186 = pneg %p82
        %p187 = pneg %p79
        %p188 = pneg %p108
        %p189 = pneg %p105
        %s190 = smul.u32 2, %s19
        %p191 = scmp.lt.s32.totalorder %s190, 3
        %s192 = scalar_select %p191, %s190, 3
        %s193 = smul.addr %s192, 8
        %s194 = smul.addr %s193, 8
        %s195 = scalar_lea.vmem %s3, %s194
        %p196 = pneg %p134
        %p197 = pneg %p131
        %s198 = sand.u32 %s121, 1
        %s199 = scalar_lea.sflag [#allocation3], %s198
        %s200 = sand.u32 %s121, 1
        %s201 = smul.addr %s200, 2
        %s202 = scalar_lea.vmem [#allocation2], %s201
        %s203 = smul.u32 2, %s19
        %p204 = scmp.lt.s32.totalorder %s203, 3
        %s205 = scalar_select %p204, %s203, 3
        %s206 = smul.addr %s205, 8
        %s207 = smul.addr %s206, 8
        %s208 = scalar_lea.vmem %s0, %s207
        %s209 = smul.u32 2, %s19
        %s210 = smul.u32 2, %s19
        %p211 = scmp.lt.s32.totalorder %s210, 3
        %s212 = scalar_select %p211, %s210, 3
        %s213 = smul.addr %s212, 8
        %s214 = smul.addr %s213, 8
        %s215 = scalar_lea.vmem %s3, %s214
        %s216 = smul.u32 2, %s19
        %s217 = smul.u32 2, %s19
        %v218 = vld [vmem:[%s208] sm:$0xff]
        %v219 = vld [vmem:[%s208 + $0x8] sm:$0xff]
        %v220 = vld [vmem:[%s208 + $0x10] sm:$0xff]
        %v221 = vld [vmem:[%s208 + $0x18] sm:$0xff]
        %v222 = vld [vmem:[%s208 + $0x20] sm:$0xff]
        %v223 = vld [vmem:[%s208 + $0x28] sm:$0xff]
        %v224 = vld [vmem:[%s208 + $0x30] sm:$0xff]
        %v225 = vld [vmem:[%s208 + $0x38] sm:$0xff]
        %v226 = vld [vmem:[%s208 + $0x40] sm:$0xff]
        %v227 = vld [vmem:[%s208 + $0x48] sm:$0xff]
        %v228 = vld [vmem:[%s208 + $0x50] sm:$0xff]
        %v229 = vld [vmem:[%s208 + $0x58] sm:$0xff]
        %v230 = vld [vmem:[%s208 + $0x60] sm:$0xff]
        %v231 = vld [vmem:[%s208 + $0x68] sm:$0xff]
        %v232 = vld [vmem:[%s208 + $0x70] sm:$0xff]
        %v233 = vld [vmem:[%s208 + $0x78] sm:$0xff]
        %vm234 = vcmask 261120
        %v235 = vsel %vm234, %v218, 0.0
        %v236 = vsel %vm234, %v219, 0.0
        %v237 = vadd.f32 %v235, %v236
        %v238 = vsel %vm234, %v220, 0.0
        %v239 = vadd.f32 %v237, %v238
        %v240 = vsel %vm234, %v221, 0.0
        %v241 = vadd.f32 %v239, %v240
        %v242 = vsel %vm234, %v222, 0.0
        %v243 = vadd.f32 %v241, %v242
        %v244 = vsel %vm234, %v223, 0.0
        %v245 = vadd.f32 %v243, %v244
        %v246 = vsel %vm234, %v224, 0.0
        %v247 = vadd.f32 %v245, %v246
        %v248 = vsel %vm234, %v225, 0.0
        %v249 = vadd.f32 %v247, %v248
        %v250 = vrot.slane %v249, 4
        %v251 = vadd.f32 %v249, %v250
        %v252 = vrot.slane %v251, 2
        %v253 = vadd.f32 %v251, %v252
        %v254 = vrot.slane %v253, 1
        %v255 = vadd.f32 %v253, %v254
        %v256 = vsel %vm234, %v226, 0.0
        %v257 = vsel %vm234, %v227, 0.0
        %v258 = vadd.f32 %v256, %v257
        %v259 = vsel %vm234, %v228, 0.0
        %v260 = vadd.f32 %v258, %v259
        %v261 = vsel %vm234, %v229, 0.0
        %v262 = vadd.f32 %v260, %v261
        %v263 = vsel %vm234, %v230, 0.0
        %v264 = vadd.f32 %v262, %v263
        %v265 = vsel %vm234, %v231, 0.0
        %v266 = vadd.f32 %v264, %v265
        %v267 = vsel %vm234, %v232, 0.0
        %v268 = vadd.f32 %v266, %v267
        %v269 = vsel %vm234, %v233, 0.0
        %v270 = vadd.f32 %v268, %v269
        %v271 = vrot.slane %v270, 4
        %v272 = vadd.f32 %v270, %v271
        %v273 = vrot.slane %v272, 2
        %v274 = vadd.f32 %v272, %v273
        %v275 = vrot.slane %v274, 1
        %v276 = vadd.f32 %v274, %v275
        %v277 = vrcp.pop 64.0
        %v278 = vmul.f32 %v255, %v277
        %v279 = vmul.f32 %v276, %v277
        %v280 = vld [vmem:[%s1] sm:$0xff]
        %v281 = vld [vmem:[%s1 + $0x8] sm:$0xff]
        %v282 = vld [vmem:[%s1 + $0x10] sm:$0xff]
        %v283 = vld [vmem:[%s1 + $0x18] sm:$0xff]
        %vm286 = vcmask 1041409
        %v287 = vsel %vm286, %v279, %v278
        %v288 = vsel %vm234, %v287, 0
        %290 = vmatprep.subr.mxu0 0.0
        %291 = vmatpush1.msra.mxu0 %v280
        %292 = vmatprep.subr.mxu0 0.0
        %293 = vmatpush1.msra.mxu0 %v281
        %294 = vmatprep.subr.mxu0 0.0
        %295 = vmatpush1.msra.mxu0 %v282
        %296 = vmatprep.subr.mxu0 0.0
        %297 = vmatpush1.msra.mxu0 %v283
        %298 = vmatprep.subr.mxu0 0.0
        %299 = vmatpush1.msra.mxu0 0.0
        %300 = vmatprep.subr.mxu0 0.0
        %301 = vmatpush1.msra.mxu0 0.0
        %302 = vmatprep.subr.mxu0 0.0
        %303 = vmatpush1.msra.mxu0 0.0
        %304 = vmatprep.subr.mxu0 0.0
        %305 = vmatpush1.msra.mxu0 0.0
        %306 = vmatprep.subr.mxu0 0.0
        %307 = vmatpush1.msra.mxu0 0.0
        %308 = vmatprep.subr.mxu0 0.0
        %309 = vmatpush1.msra.mxu0 0.0
        %310 = vmatprep.subr.mxu0 0.0
        %311 = vmatpush1.msra.mxu0 0.0
        %312 = vmatprep.subr.mxu0 0.0
        %313 = vmatpush1.msra.mxu0 0.0
        %314 = vmatprep.subr.mxu0 0.0
        %315 = vmatpush1.msra.mxu0 0.0
        %316 = vmatprep.subr.mxu0 0.0
        %317 = vmatpush1.msra.mxu0 0.0
        %318 = vmatprep.subr.mxu0 0.0
        %319 = vmatpush1.msra.mxu0 0.0
        %320 = vmatprep.subr.mxu0 0.0
        %321 = vmatpush1.msra.mxu0 0.0
        %322 = vmatprep.subr.mxu0 0.0
        %323 = vmatpush1.msra.mxu0 0.0
        %324 = vmatprep.subr.mxu0 0.0
        %325 = vmatpush1.msra.mxu0 0.0
        %326 = vmatprep.subr.mxu0 0.0
        %327 = vmatpush1.msra.mxu0 0.0
        %328 = vmatprep.subr.mxu0 0.0
        %329 = vmatpush1.msra.mxu0 0.0
        %330 = vmatprep.subr.mxu0 0.0
        %331 = vmatpush1.msra.mxu0 0.0
        %332 = vmatprep.subr.mxu0 0.0
        %333 = vmatpush1.msra.mxu0 0.0
        %334 = vmatprep.subr.mxu0 0.0
        %335 = vmatpush1.msra.mxu0 0.0
        %336 = vmatprep.subr.mxu0 0.0
        %337 = vmatpush1.msra.mxu0 0.0
        %338 = vmatprep.subr.mxu0 0.0
        %339 = vmatpush1.msra.mxu0 0.0
        %340 = vmatprep.subr.mxu0 0.0
        %341 = vmatpush1.msra.mxu0 0.0
        %342 = vmatprep.subr.mxu0 0.0
        %343 = vmatpush1.msra.mxu0 0.0
        %344 = vmatprep.subr.mxu0 0.0
        %345 = vmatpush1.msra.mxu0 0.0
        %346 = vmatprep.subr.mxu0 0.0
        %347 = vmatpush1.msra.mxu0 0.0
        %348 = vmatprep.subr.mxu0 0.0
        %349 = vmatpush1.msra.mxu0 0.0
        %350 = vmatprep.subr.mxu0 0.0
        %351 = vmatpush1.msra.mxu0 0.0
        %352 = vmatprep.subr.mxu0 0.0
        %353 = vmatpush1.msra.mxu0 0.0
        %354 = vmatprep.mubr.f32.mxu0 0.0
        %355 = vmatmul.mubr.f32.gmra.mrb[0].mxu0 %v288
        %v356 = vpop.f32.mrb[0].mxu0
        %v357 = vadd.f32 0.0, %v356
        %v358 = vpop.f32.mrb[0].mxu0
        %359 = vdwg.mxu0
        %v360 = vmax.f32 %v357, 0.0
        %v361 = vld [vmem:[%s2] sm:$0x3]
        %vm362 = vcmask 15360
        %v364 = vsel %vm362, %v360, 0
        %vm366 = vcmask 1041408
        %v368 = vsel %vm366, %v361, 0
        %370 = vmatprep.subr.mxu0 0.0
        %371 = vmatpush1.msra.mxu0 %v368
        %372 = vmatprep.subr.mxu0 0.0
        %373 = vmatpush1.msra.mxu0 0.0
        %374 = vmatprep.subr.mxu0 0.0
        %375 = vmatpush1.msra.mxu0 0.0
        %376 = vmatprep.subr.mxu0 0.0
        %377 = vmatpush1.msra.mxu0 0.0
        %378 = vmatprep.subr.mxu0 0.0
        %379 = vmatpush1.msra.mxu0 0.0
        %380 = vmatprep.subr.mxu0 0.0
        %381 = vmatpush1.msra.mxu0 0.0
        %382 = vmatprep.subr.mxu0 0.0
        %383 = vmatpush1.msra.mxu0 0.0
        %384 = vmatprep.subr.mxu0 0.0
        %385 = vmatpush1.msra.mxu0 0.0
        %386 = vmatprep.subr.mxu0 0.0
        %387 = vmatpush1.msra.mxu0 0.0
        %388 = vmatprep.subr.mxu0 0.0
        %389 = vmatpush1.msra.mxu0 0.0
        %390 = vmatprep.subr.mxu0 0.0
        %391 = vmatpush1.msra.mxu0 0.0
        %392 = vmatprep.subr.mxu0 0.0
        %393 = vmatpush1.msra.mxu0 0.0
        %394 = vmatprep.subr.mxu0 0.0
        %395 = vmatpush1.msra.mxu0 0.0
        %396 = vmatprep.subr.mxu0 0.0
        %397 = vmatpush1.msra.mxu0 0.0
        %398 = vmatprep.subr.mxu0 0.0
        %399 = vmatpush1.msra.mxu0 0.0
        %400 = vmatprep.subr.mxu0 0.0
        %401 = vmatpush1.msra.mxu0 0.0
        %402 = vmatprep.subr.mxu0 0.0
        %403 = vmatpush1.msra.mxu0 0.0
        %404 = vmatprep.subr.mxu0 0.0
        %405 = vmatpush1.msra.mxu0 0.0
        %406 = vmatprep.subr.mxu0 0.0
        %407 = vmatpush1.msra.mxu0 0.0
        %408 = vmatprep.subr.mxu0 0.0
        %409 = vmatpush1.msra.mxu0 0.0
        %410 = vmatprep.subr.mxu0 0.0
        %411 = vmatpush1.msra.mxu0 0.0
        %412 = vmatprep.subr.mxu0 0.0
        %413 = vmatpush1.msra.mxu0 0.0
        %414 = vmatprep.subr.mxu0 0.0
        %415 = vmatpush1.msra.mxu0 0.0
        %416 = vmatprep.subr.mxu0 0.0
        %417 = vmatpush1.msra.mxu0 0.0
        %418 = vmatprep.subr.mxu0 0.0
        %419 = vmatpush1.msra.mxu0 0.0
        %420 = vmatprep.subr.mxu0 0.0
        %421 = vmatpush1.msra.mxu0 0.0
        %422 = vmatprep.subr.mxu0 0.0
        %423 = vmatpush1.msra.mxu0 0.0
        %424 = vmatprep.subr.mxu0 0.0
        %425 = vmatpush1.msra.mxu0 0.0
        %426 = vmatprep.subr.mxu0 0.0
        %427 = vmatpush1.msra.mxu0 0.0
        %428 = vmatprep.subr.mxu0 0.0
        %429 = vmatpush1.msra.mxu0 0.0
        %430 = vmatprep.subr.mxu0 0.0
        %431 = vmatpush1.msra.mxu0 0.0
        %432 = vmatprep.subr.mxu0 0.0
        %433 = vmatpush1.msra.mxu0 0.0
        %434 = vmatprep.mubr.f32.mxu0 0.0
        %435 = vmatmul.mubr.f32.gmra.mrb[0].mxu0 %v364
        %v436 = vpop.f32.mrb[0].mxu0
        %v437 = vadd.f32 0.0, %v436
        %v438 = vpop.f32.mrb[0].mxu0
        %439 = vdwg.mxu0
        %v440 = vxor.u32 %v437, 2147483648
        %v441 = vmul.f32 %v440, 1.442695
        %v442 = vpow.pop %v441
        %v443 = vadd.f32 %v442, 1.0
        %v444 = vrcp.pop %v443
        %v445 = vmul.f32 1.0, %v444
        %v448 = vunpack.c.l.s4 1966171168
        %v449 = vunpack.c.0.s8 %v448
        %v450 = vlaneseq
        %v451 = vshrl.u32 %v450, 7
        %v452 = vsub.s32 %v449, %v451
        %v453 = vrot.slane %v445, %v452
        %v454 = vcombine.high %v453, %v453
        %v456 = vunpack.c.l.s4 1966171168
        %v457 = vunpack.c.0.s8 %v456
        %v458 = vlaneseq
        %v459 = vshrl.u32 %v458, 7
        %v460 = vsub.s32 %v457, %v459
        %v461 = vrot.slane %v453, %v460
        %v463 = vunpack.c.l.s4 1966171168
        %v464 = vunpack.c.0.s8 %v463
        %v465 = vlaneseq
        %v466 = vshrl.u32 %v465, 7
        %v467 = vsub.s32 %v464, %v466
        %v468 = vrot.slane %v454, %v467
        %vm471 = vcmask 253952
        %472 = vst.msk [vmem:[%s202] sm:$0x1] %vm471, %v461
        %473 = vst.msk [vmem:[%s202 + $0x1] sm:$0x1] %vm471, %v468
        %v474 = vlaneseq
        %v475 = vshrl.u32 %v474, 7
        %v476 = vsub.s32 0, %v475
        %v477 = vrot.slane %v461, %v476
        %v478 = vlaneseq
        %v479 = vshrl.u32 %v478, 7
        %v480 = vsub.s32 0, %v479
        %v481 = vrot.slane %v468, %v480
        %v484 = vmul.f32 %v218, %v477
        %v485 = vmul.f32 %v219, %v477
        %v486 = vmul.f32 %v220, %v477
        %v487 = vmul.f32 %v221, %v477
        %v488 = vmul.f32 %v222, %v477
        %v489 = vmul.f32 %v223, %v477
        %v490 = vmul.f32 %v224, %v477
        %v491 = vmul.f32 %v225, %v477
        %v492 = vmul.f32 %v226, %v481
        %v493 = vmul.f32 %v227, %v481
        %v494 = vmul.f32 %v228, %v481
        %v495 = vmul.f32 %v229, %v481
        %v496 = vmul.f32 %v230, %v481
        %v497 = vmul.f32 %v231, %v481
        %v498 = vmul.f32 %v232, %v481
        %v499 = vmul.f32 %v233, %v481
        %500 = vst.msk [vmem:[%s215] sm:$0xff] %vm234, %v484
        %501 = vst.msk [vmem:[%s215 + $0x8] sm:$0xff] %vm234, %v485
        %502 = vst.msk [vmem:[%s215 + $0x10] sm:$0xff] %vm234, %v486
        %503 = vst.msk [vmem:[%s215 + $0x18] sm:$0xff] %vm234, %v487
        %504 = vst.msk [vmem:[%s215 + $0x20] sm:$0xff] %vm234, %v488
        %505 = vst.msk [vmem:[%s215 + $0x28] sm:$0xff] %vm234, %v489
        %506 = vst.msk [vmem:[%s215 + $0x30] sm:$0xff] %vm234, %v490
        %507 = vst.msk [vmem:[%s215 + $0x38] sm:$0xff] %vm234, %v491
        %508 = vst.msk [vmem:[%s215 + $0x40] sm:$0xff] %vm234, %v492
        %509 = vst.msk [vmem:[%s215 + $0x48] sm:$0xff] %vm234, %v493
        %510 = vst.msk [vmem:[%s215 + $0x50] sm:$0xff] %vm234, %v494
        %511 = vst.msk [vmem:[%s215 + $0x58] sm:$0xff] %vm234, %v495
        %512 = vst.msk [vmem:[%s215 + $0x60] sm:$0xff] %vm234, %v496
        %513 = vst.msk [vmem:[%s215 + $0x68] sm:$0xff] %vm234, %v497
        %514 = vst.msk [vmem:[%s215 + $0x70] sm:$0xff] %vm234, %v498
        %515 = vst.msk [vmem:[%s215 + $0x78] sm:$0xff] %vm234, %v499
        %s516 = smul.u32 2, %s19
        %p517 = scmp.lt.s32.totalorder %s516, 3
        %s518 = scalar_select %p517, %s516, 3
        %s519 = smul.addr %s518, 8
        %s520 = smul.addr %s519, 8
        %s521 = scalar_lea.vmem %s3, %s520
        %s522 = sand.u32 %s121, 1
        %s523 = scalar_lea.sflag [#allocation3], %s522
        %s524 = sand.u32 %s121, 1
        %s525 = smul.addr %s524, 2
        %s526 = scalar_lea.vmem [#allocation2], %s525
        // Predicated region
        $region33: #{tpu_custom_call.1} parent=31 // pred_check
          %p527 = pneg %p105
        $region34: #{tpu_custom_call.1} parent=31 // pred_check_branch
          %529 = sbr.rel (%p527) target = $region36
        $region35: #{tpu_custom_call.1} parent=31 // pred_region
          %s530 = smul.u32 2, %s19
        $region36: #{tpu_custom_call.1} parent=31 // pred_fallthru
          _
        // Predicated region
        $region37: #{tpu_custom_call.1} parent=31 // pred_check
          %p531 = pneg %p131
        $region38: #{tpu_custom_call.1} parent=31 // pred_check_branch
          %533 = sbr.rel (%p531) target = $region40
        $region39: #{tpu_custom_call.1} parent=31 // pred_region
          %s534 = smul.u32 2, %s19
          %s536 = ssub.s32 32, 32
          %537 = vsyncadd %s523, %s536
          %s538 = smul.addr %s534, 16
          %s539 = scalar_lea.hbm %s4, %s538
          %s540 = sshll.u32 %s526, 4
          %s541 = int_to_ptr.vmem [resolvable:$true] %s540
          %546 = dma.vmem_to_hbm [thread:$0]  %s541, 32, %s539, %s523, 16, 16, 1
        $region40: #{tpu_custom_call.1} parent=31 // pred_fallthru
          _
      $region32: #{tpu_custom_call.1} parent=5 // pred_fallthru
        _
      %p547 = scmp.le.s32.totalorder 2, %s14
      // Predicated region
      $region41: #{tpu_custom_call.1} parent=5 // pred_check
        %p548 = pneg %p547
      $region42: #{tpu_custom_call.1} parent=5 // pred_check_branch
        %550 = sbr.rel (%p548) target = $region44
      $region43: #{tpu_custom_call.1} parent=5 // pred_region
        %s551 = ssub.s32 %s14, 2
        // Predicated region
        $region45: #{tpu_custom_call.1} parent=43 // pred_check
          %p552 = pneg %p111
        $region46: #{tpu_custom_call.1} parent=43 // pred_check_branch
          %554 = sbr.rel (%p552) target = $region48
        $region47: #{tpu_custom_call.1} parent=43 // pred_region
          %s555 = smul.u32 2, %s20
          %p556 = scmp.lt.s32.totalorder %s555, 3
          %s557 = scalar_select %p556, %s555, 3
          %s558 = smul.addr %s557, 8
          %s559 = smul.addr %s558, 8
          %s560 = scalar_lea.vmem %s3, %s559
        $region48: #{tpu_custom_call.1} parent=43 // pred_fallthru
          _
        // Predicated region
        $region49: #{tpu_custom_call.1} parent=43 // pred_check
          %p561 = pneg %p137
        $region50: #{tpu_custom_call.1} parent=43 // pred_check_branch
          %563 = sbr.rel (%p561) target = $region52
        $region51: #{tpu_custom_call.1} parent=43 // pred_region
          %s564 = sand.u32 %s122, 1
          %s565 = scalar_lea.sflag [#allocation3], %s564
          %s566 = sand.u32 %s122, 1
          %s567 = smul.addr %s566, 2
          %s568 = scalar_lea.vmem [#allocation2], %s567
          %569 = dma.done %s565, 32
        $region52: #{tpu_custom_call.1} parent=43 // pred_fallthru
          _
      $region44: #{tpu_custom_call.1} parent=5 // pred_fallthru
        _
    $region6: #{tpu_custom_call.1} parent=1 // loop_footer
      %s18 = sadd.s32 1, %s14
    $region7: #{tpu_custom_call.1} parent=1 // loop_footer_branch
      %13 = sbr.rel target = $region3
    $region8: #{tpu_custom_call.1} parent=1 // loop_exit
      _
    %570 = vsyncpa [#allocation3], 1
    %s571 = scalar_lea.sflag [#allocation3], 1
    %572 = vsyncpa %s571, 1

</llo_original>
